<compile_context>
chip_gen: v7x
topology: tpu7x:2x2x1
jax: 0.10.0
libtpu: 0.0.40
codegen_flags: <defaults>
</compile_context>

<pallas_src>
import functools

import jax
import jax.numpy as jnp
from jax.experimental import pallas as pl
from jax.experimental.pallas import tpu as pltpu


def _pad(kernel_size, dilation=1):
    # "same" padding for odd kernel sizes with dilation=1 (matches the PyTorch
    # module's _pad for d=1).
    return dilation * (kernel_size - 1) // 2


def _conv_bn_act_kernel(x_ref, s_ref, w_ref, b_ref, o_ref, *, K, act):
    """One grid step = NB whole images.

    x_ref: (NB*H, W*C1)        flattened input rows (lane axis = W*C1)
    s_ref: (K, NB*H, NB*H)     block-diagonal 0/1 row-selection per tap kh
                               (realizes the kh row shift + H zero padding)
    w_ref: (K, W*C1, W*C2)     block-Toeplitz weights per tap kh, BN scale
                               folded in; W zero padding encoded as zeros
    b_ref: (1, W*C2)           BN bias (lane-flattened), f32
    o_ref: (NB*H, W*C2)        output rows, lane-dense last dim
    """
    x = x_ref[...]
    acc = jnp.zeros(o_ref.shape, jnp.float32)
    for kh in range(K):                                   # static unroll
        # Row shift (+ H-border zeroing) as a tiny 0/1 matmul: stays on the
        # MXU, no XLU relayout, no in-kernel pad.
        xs = jnp.dot(s_ref[kh], x, preferred_element_type=jnp.float32)
        xs = xs.astype(x.dtype)
        # All kw taps and all input channels in one contraction of width W*C1,
        # producing all W*C2 output lanes at once.
        acc = acc + jnp.dot(xs, w_ref[kh], preferred_element_type=jnp.float32)
    y = acc + b_ref[...]                                  # BN bias (scale folded)
    if act is not None:
        y = act(y)
    o_ref[...] = y.astype(o_ref.dtype)


def conv2d_act(x_nchw, weight, gamma, beta, running_mean, running_var,
               *, eps=1e-3, act=None, compute_dtype=None, images_per_block=None):
    """Conv2dAct forward (odd k, stride=1, dilation=1, groups=1, no conv bias).

    x_nchw: (N, C1, H, W); weight: (C2, C1, K, K). Returns (N, C2, H, W).
    """
    N, C1, H, W = x_nchw.shape
    C2, C1w, K, Kw = weight.shape
    assert C1w == C1 and Kw == K and K % 2 == 1, "only odd square kernels, groups=1"
    p = _pad(K)
    cdt = x_nchw.dtype if compute_dtype is None else compute_dtype
    f32 = jnp.float32

    # ---- one-time parameter prep (plain JAX, tiny constants) ----
    scale = gamma.astype(f32) * jax.lax.rsqrt(running_var.astype(f32) + eps)  # (C2,)
    bias = beta.astype(f32) - running_mean.astype(f32) * scale                # (C2,)
    bias_row = jnp.tile(bias, W)[None, :]                                     # (1, W*C2)

    # Fold the BN scale into the conv weights (exact in real arithmetic).
    w_s = weight.astype(f32) * scale[:, None, None, None]                     # (C2,C1,K,K)

    # Block-Toeplitz weights:
    #   Wm[kh, w_in*C1 + c1, w_out*C2 + c2] = w_s[c2, c1, kh, w_in - w_out + p]
    # (zero outside the kw range), which also realizes W "same" zero padding.
    w_t = jnp.transpose(w_s, (2, 3, 1, 0))                                    # (kh, kw, c1, c2)
    wi = jnp.arange(W)
    kw_idx = wi[:, None] - wi[None, :] + p                                    # (W_in, W_out)
    valid = ((kw_idx >= 0) & (kw_idx < K)).astype(f32)
    wm = w_t[:, jnp.clip(kw_idx, 0, K - 1)] * valid[None, :, :, None, None]   # (K,Wi,Wo,C1,C2)
    wm = jnp.transpose(wm, (0, 1, 3, 2, 4)).reshape(K, W * C1, W * C2)

    # ---- choose how many images per grid step (target ~128 matmul rows) ----
    if images_per_block is None:
        NB = max(1, 128 // H)
    else:
        NB = images_per_block
    NB = max(1, min(NB, N))
    while (NB * H) % 8 != 0:          # keep sublane tiling clean
        NB += 1
    NBH = NB * H
    N_pad = -(-N // NB) * NB

    # Block-diagonal row-selection matrices:
    #   S[kh, n*H + h_out, n*H + h_in] = 1 iff h_in == h_out + kh - p
    # (only within the same image n). Out-of-range rows select nothing ->
    # H-direction zero padding for free.
    rr = jnp.arange(NBH)
    img = rr // H
    hh = rr % H
    koff = jnp.arange(K)[:, None, None] - p
    sel = ((img[None, :, None] == img[None, None, :]) &
           (hh[None, None, :] == hh[None, :, None] + koff)).astype(f32)       # (K, NBH, NBH)

    # ---- input layout: NCHW -> (N_pad*H, W*C1)  (single transpose pass) ----
    x_hwc = jnp.transpose(x_nchw, (0, 2, 3, 1)).reshape(N, H, W * C1)
    if N_pad != N:
        x_hwc = jnp.concatenate(
            [x_hwc, jnp.zeros((N_pad - N, H, W * C1), x_hwc.dtype)], axis=0)
    x_flat = x_hwc.reshape(N_pad * H, W * C1).astype(cdt)

    WC1, WC2 = W * C1, W * C2
    kernel = functools.partial(_conv_bn_act_kernel, K=K, act=act)

    out_flat = pl.pallas_call(
        kernel,
        out_shape=jax.ShapeDtypeStruct((N_pad * H, WC2), x_nchw.dtype),
        grid_spec=pltpu.PrefetchScalarGridSpec(
            num_scalar_prefetch=0,
            grid=(N_pad // NB,),
            in_specs=[
                pl.BlockSpec((NBH, WC1), lambda i: (i, 0)),
                pl.BlockSpec((K, NBH, NBH), lambda i: (0, 0, 0)),   # resident
                pl.BlockSpec((K, WC1, WC2), lambda i: (0, 0, 0)),   # resident
                pl.BlockSpec((1, WC2), lambda i: (0, 0)),           # resident
            ],
            out_specs=pl.BlockSpec((NBH, WC2), lambda i: (i, 0)),
        ),
        compiler_params=pltpu.CompilerParams(
            dimension_semantics=("parallel",)),
    )(x_flat, sel.astype(cdt), wm.astype(cdt), bias_row)

    # (N_pad*H, W*C2) -> NCHW (single transpose pass; module contract is NCHW)
    out = out_flat.reshape(N_pad, H, W, C2)[:N]
    return jnp.transpose(out, (0, 3, 1, 2))


if __name__ == "__main__":
    # Module config: Conv2dAct(c1=4, c2=8, k=3, s=1, p=None->1, d=1, g=1, act=None)
    N, C1, H, W = 2, 4, 16, 16
    C2, K = 8, 3

    key = jax.random.PRNGKey(0)
    kx, kw = jax.random.split(key)
    x = jax.random.normal(kx, (N, C1, H, W), dtype=jnp.float32)
    fan_in = C1 * K * K
    weight = jax.random.normal(kw, (C2, C1, K, K), dtype=jnp.float32) * (fan_in ** -0.5)
    # BatchNorm2d default parameters (eval mode)
    gamma = jnp.ones((C2,), jnp.float32)
    beta = jnp.zeros((C2,), jnp.float32)
    running_mean = jnp.zeros((C2,), jnp.float32)
    running_var = jnp.ones((C2,), jnp.float32)

    out = conv2d_act(x, weight, gamma, beta, running_mean, running_var,
                     eps=1e-3, act=None)
    out = jax.block_until_ready(out)

    # Reference: XLA conv + eval-mode BatchNorm
    ref_conv = jax.lax.conv_general_dilated(
        x, weight, window_strides=(1, 1), padding=((1, 1), (1, 1)),
        dimension_numbers=("NCHW", "OIHW", "NCHW"))
    ref = (ref_conv - running_mean[None, :, None, None]) / jnp.sqrt(
        running_var[None, :, None, None] + 1e-3) * gamma[None, :, None, None] \
        + beta[None, :, None, None]

    assert out.shape == (N, C2, H, W)
    assert jnp.allclose(out, ref, atol=1e-4, rtol=1e-4), \
        float(jnp.max(jnp.abs(out - ref)))
    print("KERNEL_OK")
</pallas_src>

<mosaic_0001>
module attributes {stable_mosaic.version = 11 : i64} {
  func.func @_conv_bn_act_kernel(%arg0: i32, %arg1: memref<32x64xf32, #tpu.memory_space<vmem>>, %arg2: memref<3x32x32xf32, #tpu.memory_space<vmem>>, %arg3: memref<3x64x128xf32, #tpu.memory_space<vmem>>, %arg4: memref<1x128xf32, #tpu.memory_space<vmem>>, %arg5: memref<32x128xf32, #tpu.memory_space<vmem>>) attributes {dimension_semantics = [#tpu.dimension_semantics<parallel>], iteration_bounds = array<i64: 1>, scalar_prefetch = 0 : i64, scratch_operands = 0 : i64, tpu.core_type = #tpu.core_type<tc>, window_params = [{transform_indices = @transform_0, window_bounds = array<i64: 32, 64>}, {pipeline_mode = #tpu.pipeline_mode<synchronous>, transform_indices = @transform_1, window_bounds = array<i64: 3, 32, 32>}, {pipeline_mode = #tpu.pipeline_mode<synchronous>, transform_indices = @transform_2, window_bounds = array<i64: 3, 64, 128>}, {pipeline_mode = #tpu.pipeline_mode<synchronous>, transform_indices = @transform_3, window_bounds = array<i64: 1, 128>}, {transform_indices = @transform_4, window_bounds = array<i64: 32, 128>}]} {
    %c0 = arith.constant 0 : index
    %c0_0 = arith.constant 0 : index
    %0 = vector.load %arg1[%c0, %c0_0] : memref<32x64xf32, #tpu.memory_space<vmem>>, vector<32x64xf32>
    %cst = arith.constant 0.000000e+00 : f32
    %1 = vector.broadcast %cst : f32 to vector<32x128xf32>
    %c0_1 = arith.constant 0 : index
    %c0_2 = arith.constant 0 : index
    %c0_3 = arith.constant 0 : index
    %2 = vector.load %arg2[%c0_1, %c0_2, %c0_3] : memref<3x32x32xf32, #tpu.memory_space<vmem>>, vector<1x32x32xf32>
    %3 = vector.shape_cast %2 : vector<1x32x32xf32> to vector<32x32xf32>
    %cst_4 = arith.constant dense<0.000000e+00> : vector<32x64xf32>
    %4 = tpu.matmul %3, %0, %cst_4 {dimension_numbers = #tpu.dot_dimension_numbers<[1], [0], [0], [1], [0, 0, 1, 1], [], []>} : vector<32x32xf32>, vector<32x64xf32>, vector<32x64xf32> -> vector<32x64xf32>
    %c0_5 = arith.constant 0 : index
    %c0_6 = arith.constant 0 : index
    %c0_7 = arith.constant 0 : index
    %5 = vector.load %arg3[%c0_5, %c0_6, %c0_7] : memref<3x64x128xf32, #tpu.memory_space<vmem>>, vector<1x64x128xf32>
    %6 = vector.shape_cast %5 : vector<1x64x128xf32> to vector<64x128xf32>
    %cst_8 = arith.constant dense<0.000000e+00> : vector<32x128xf32>
    %7 = tpu.matmul %4, %6, %cst_8 {dimension_numbers = #tpu.dot_dimension_numbers<[1], [0], [0], [1], [0, 0, 1, 1], [], []>} : vector<32x64xf32>, vector<64x128xf32>, vector<32x128xf32> -> vector<32x128xf32>
    %8 = arith.addf %1, %7 : vector<32x128xf32>
    %c1 = arith.constant 1 : index
    %c0_9 = arith.constant 0 : index
    %c0_10 = arith.constant 0 : index
    %9 = vector.load %arg2[%c1, %c0_9, %c0_10] : memref<3x32x32xf32, #tpu.memory_space<vmem>>, vector<1x32x32xf32>
    %10 = vector.shape_cast %9 : vector<1x32x32xf32> to vector<32x32xf32>
    %cst_11 = arith.constant dense<0.000000e+00> : vector<32x64xf32>
    %11 = tpu.matmul %10, %0, %cst_11 {dimension_numbers = #tpu.dot_dimension_numbers<[1], [0], [0], [1], [0, 0, 1, 1], [], []>} : vector<32x32xf32>, vector<32x64xf32>, vector<32x64xf32> -> vector<32x64xf32>
    %c1_12 = arith.constant 1 : index
    %c0_13 = arith.constant 0 : index
    %c0_14 = arith.constant 0 : index
    %12 = vector.load %arg3[%c1_12, %c0_13, %c0_14] : memref<3x64x128xf32, #tpu.memory_space<vmem>>, vector<1x64x128xf32>
    %13 = vector.shape_cast %12 : vector<1x64x128xf32> to vector<64x128xf32>
    %cst_15 = arith.constant dense<0.000000e+00> : vector<32x128xf32>
    %14 = tpu.matmul %11, %13, %cst_15 {dimension_numbers = #tpu.dot_dimension_numbers<[1], [0], [0], [1], [0, 0, 1, 1], [], []>} : vector<32x64xf32>, vector<64x128xf32>, vector<32x128xf32> -> vector<32x128xf32>
    %15 = arith.addf %8, %14 : vector<32x128xf32>
    %c2 = arith.constant 2 : index
    %c0_16 = arith.constant 0 : index
    %c0_17 = arith.constant 0 : index
    %16 = vector.load %arg2[%c2, %c0_16, %c0_17] : memref<3x32x32xf32, #tpu.memory_space<vmem>>, vector<1x32x32xf32>
    %17 = vector.shape_cast %16 : vector<1x32x32xf32> to vector<32x32xf32>
    %cst_18 = arith.constant dense<0.000000e+00> : vector<32x64xf32>
    %18 = tpu.matmul %17, %0, %cst_18 {dimension_numbers = #tpu.dot_dimension_numbers<[1], [0], [0], [1], [0, 0, 1, 1], [], []>} : vector<32x32xf32>, vector<32x64xf32>, vector<32x64xf32> -> vector<32x64xf32>
    %c2_19 = arith.constant 2 : index
    %c0_20 = arith.constant 0 : index
    %c0_21 = arith.constant 0 : index
    %19 = vector.load %arg3[%c2_19, %c0_20, %c0_21] : memref<3x64x128xf32, #tpu.memory_space<vmem>>, vector<1x64x128xf32>
    %20 = vector.shape_cast %19 : vector<1x64x128xf32> to vector<64x128xf32>
    %cst_22 = arith.constant dense<0.000000e+00> : vector<32x128xf32>
    %21 = tpu.matmul %18, %20, %cst_22 {dimension_numbers = #tpu.dot_dimension_numbers<[1], [0], [0], [1], [0, 0, 1, 1], [], []>} : vector<32x64xf32>, vector<64x128xf32>, vector<32x128xf32> -> vector<32x128xf32>
    %22 = arith.addf %15, %21 : vector<32x128xf32>
    %c0_23 = arith.constant 0 : index
    %c0_24 = arith.constant 0 : index
    %23 = vector.load %arg4[%c0_23, %c0_24] : memref<1x128xf32, #tpu.memory_space<vmem>>, vector<1x128xf32>
    %24 = vector.broadcast %23 : vector<1x128xf32> to vector<32x128xf32>
    %25 = arith.addf %22, %24 : vector<32x128xf32>
    %c0_25 = arith.constant 0 : index
    %c0_26 = arith.constant 0 : index
    %26 = vector.load %arg5[%c0_25, %c0_26] : memref<32x128xf32, #tpu.memory_space<vmem>>, vector<32x128xf32>
    tpu.vector_store %arg5[%c0_25, %c0_26], %25 {strides = array<i32>} : memref<32x128xf32, #tpu.memory_space<vmem>>, vector<32x128xf32>,
    return
  }
  func.func @transform_0(%arg0: i32) -> (i32, i32) {
    %c0_i32 = arith.constant 0 : i32
    %c0_i32_0 = arith.constant 0 : i32
    return %arg0, %c0_i32 : i32, i32
  }
  func.func @transform_1(%arg0: i32) -> (i32, i32, i32) {
    %c0_i32 = arith.constant 0 : i32
    %c0_i32_0 = arith.constant 0 : i32
    %c0_i32_1 = arith.constant 0 : i32
    %c0_i32_2 = arith.constant 0 : i32
    return %c0_i32, %c0_i32_0, %c0_i32_1 : i32, i32, i32
  }
  func.func @transform_2(%arg0: i32) -> (i32, i32, i32) {
    %c0_i32 = arith.constant 0 : i32
    %c0_i32_0 = arith.constant 0 : i32
    %c0_i32_1 = arith.constant 0 : i32
    %c0_i32_2 = arith.constant 0 : i32
    return %c0_i32, %c0_i32_0, %c0_i32_1 : i32, i32, i32
  }
  func.func @transform_3(%arg0: i32) -> (i32, i32) {
    %c0_i32 = arith.constant 0 : i32
    %c0_i32_0 = arith.constant 0 : i32
    %c0_i32_1 = arith.constant 0 : i32
    return %c0_i32, %c0_i32_0 : i32, i32
  }
  func.func @transform_4(%arg0: i32) -> (i32, i32) {
    %c0_i32 = arith.constant 0 : i32
    %c0_i32_0 = arith.constant 0 : i32
    return %arg0, %c0_i32 : i32, i32
  }
}

</mosaic_0001>

<llo_original>
// kernel: tpu_custom_call.1
$region0: #{tpu_custom_call.1}
  #allocation0 [shape = 'u32[]', space=smem, size = 0x4, offset = 0x4, fixed_abs, tag = 'smem constant byte address 0x4 - core index']
  #allocation1 [shape = 'u32[144,128]{1,0:T(1,128)}', space=vmem, size = 0x12000, scoped, tag = 'internal scratch']
  %s0 = inlined_call_operand.hbm [shape: f32[32,64], index: 0, kind: input, shape index: {}]
  %s1 = inlined_call_operand.hbm [shape: f32[3,32,32], index: 1, kind: input, shape index: {}]
  %s2 = inlined_call_operand.hbm [shape: f32[3,64,128], index: 2, kind: input, shape index: {}]
  %s3 = inlined_call_operand.vmem [shape: f32[1,128], index: 3, kind: input, shape index: {}]
  %s4 = inlined_call_operand.hbm [shape: f32[32,128], index: 4, kind: output, shape index: {}]
  %s5 = sld [smem:[#allocation0]]
  $region38: #{tpu_custom_call.1} parent=0
    _
  %s7 = ssub.s32 1, %s5
  %s8 = scalar_select 0, %s7, %s5
  $region1: #{tpu_custom_call.1} parent=0
    #allocation2 [shape = 'u8[16384]{0}', space=vmem, size = 0x4000, scoped, tag = 'input window, operand 0, single buffered']
    #allocation3 [shape = 's32[1]{0}', space=sflag, size = 0x4, scoped, tag = 'scoped memory for tpu_custom_call.1']
    #allocation4 [shape = 's32[1]{0}', space=sflag, size = 0x4, scoped, tag = 'scoped memory for tpu_custom_call.1']
    #allocation5 [shape = 'u8[49152]{0}', space=vmem, size = 0xc000, scoped, tag = 'input window, operand 1, single buffered']
    #allocation6 [shape = 's32[1]{0}', space=sflag, size = 0x4, scoped, tag = 'scoped memory for tpu_custom_call.1']
    #allocation7 [shape = 'u8[98304]{0}', space=vmem, size = 0x18000, scoped, tag = 'input window, operand 2, single buffered']
    #allocation8 [shape = 'u8[16384]{0}', space=vmem, size = 0x4000, scoped, tag = 'output window, operand 0, single buffered']
    %9 = vsyncpa [#allocation3], 0
    %10 = vsyncpa [#allocation6], 0
    %11 = vsyncpa [#allocation4], 0
    // Predicated region
    $region2: #{tpu_custom_call.1} parent=1 // pred_check
      _
    $region3: #{tpu_custom_call.1} parent=1 // pred_check_branch
      %13 = sbr.rel (0) target = $region5
    $region4: #{tpu_custom_call.1} parent=1 // pred_region
      %s15 = ssub.s32 512, 512
      %16 = vsyncadd [#allocation3], %s15
      %s17 = sshll.u32 [#allocation2], 4
      %s18 = int_to_ptr.vmem [resolvable:$true] %s17
      %23 = dma.hbm_to_vmem [thread:$0]  %s0, 512, %s18, [#allocation3], 128, 128, 8
    $region5: #{tpu_custom_call.1} parent=1 // pred_fallthru
      _
    // Predicated region
    $region6: #{tpu_custom_call.1} parent=1 // pred_check
      _
    $region7: #{tpu_custom_call.1} parent=1 // pred_check_branch
      %25 = sbr.rel (0) target = $region9
    $region8: #{tpu_custom_call.1} parent=1 // pred_region
      %s27 = ssub.s32 1536, 1536
      %28 = vsyncadd [#allocation6], %s27
      %s29 = sshll.u32 [#allocation5], 4
      %s30 = int_to_ptr.vmem [resolvable:$true] %s29
      %35 = dma.hbm_to_vmem [thread:$0]  %s1, 1536, %s30, [#allocation6], 128, 128, 8
    $region9: #{tpu_custom_call.1} parent=1 // pred_fallthru
      _
    // Predicated region
    $region10: #{tpu_custom_call.1} parent=1 // pred_check
      _
    $region11: #{tpu_custom_call.1} parent=1 // pred_check_branch
      %37 = sbr.rel (0) target = $region13
    $region12: #{tpu_custom_call.1} parent=1 // pred_region
      %s39 = ssub.s32 3072, 3072
      %40 = vsyncadd [#allocation6], %s39
      %s41 = sshll.u32 [#allocation7], 4
      %s42 = int_to_ptr.vmem [resolvable:$true] %s41
      %47 = dma.hbm_to_vmem [thread:$0]  %s2, 3072, %s42, [#allocation6], 128, 128, 8
    $region13: #{tpu_custom_call.1} parent=1 // pred_fallthru
      _
    // Predicated region
    $region14: #{tpu_custom_call.1} parent=1 // pred_check
      _
    $region15: #{tpu_custom_call.1} parent=1 // pred_check_branch
      %49 = sbr.rel (0) target = $region17
    $region16: #{tpu_custom_call.1} parent=1 // pred_region
      _
    $region17: #{tpu_custom_call.1} parent=1 // pred_fallthru
      _
    // Predicated region
    $region18: #{tpu_custom_call.1} parent=1 // pred_check
      _
    $region19: #{tpu_custom_call.1} parent=1 // pred_check_branch
      %51 = sbr.rel (0) target = $region21
    $region20: #{tpu_custom_call.1} parent=1 // pred_region
      %52 = dma.done [#allocation3], 512
    $region21: #{tpu_custom_call.1} parent=1 // pred_fallthru
      _
    // Predicated region
    $region22: #{tpu_custom_call.1} parent=1 // pred_check
      _
    $region23: #{tpu_custom_call.1} parent=1 // pred_check_branch
      %54 = sbr.rel (0) target = $region25
    $region24: #{tpu_custom_call.1} parent=1 // pred_region
      %55 = dma.done [#allocation6], 1536
    $region25: #{tpu_custom_call.1} parent=1 // pred_fallthru
      _
    // Predicated region
    $region26: #{tpu_custom_call.1} parent=1 // pred_check
      _
    $region27: #{tpu_custom_call.1} parent=1 // pred_check_branch
      %57 = sbr.rel (0) target = $region29
    $region28: #{tpu_custom_call.1} parent=1 // pred_region
      %58 = dma.done [#allocation6], 3072
    $region29: #{tpu_custom_call.1} parent=1 // pred_fallthru
      _
    %v59 = vld [vmem:[#allocation2] sm:$0xff]
    %v60 = vld [vmem:[#allocation2 + $0x8] sm:$0xff]
    %v61 = vld [vmem:[#allocation2 + $0x10] sm:$0xff]
    %v62 = vld [vmem:[#allocation2 + $0x18] sm:$0xff]
    %v63 = vld [vmem:[#allocation5] sm:$0xff]
    %v64 = vld [vmem:[#allocation5 + $0x8] sm:$0xff]
    %v65 = vld [vmem:[#allocation5 + $0x10] sm:$0xff]
    %v66 = vld [vmem:[#allocation5 + $0x18] sm:$0xff]
    %vm67 = vcmask 261120
    %v69 = vsel %vm67, %v63, 0
    %v72 = vsel %vm67, %v64, 0
    %v75 = vsel %vm67, %v65, 0
    %v78 = vsel %vm67, %v66, 0
    %80 = vmatprep.subr.mxu0 0.0
    %81 = vmatpush1.msra.mxu0 %v59
    %82 = vmatprep.subr.mxu0 0.0
    %83 = vmatpush1.msra.mxu0 %v60
    %84 = vmatprep.subr.mxu0 0.0
    %85 = vmatpush1.msra.mxu0 %v61
    %86 = vmatprep.subr.mxu0 0.0
    %87 = vmatpush1.msra.mxu0 %v62
    %88 = vmatprep.subr.mxu0 0.0
    %89 = vmatpush1.msra.mxu0 0.0
    %90 = vmatprep.subr.mxu0 0.0
    %91 = vmatpush1.msra.mxu0 0.0
    %92 = vmatprep.subr.mxu0 0.0
    %93 = vmatpush1.msra.mxu0 0.0
    %94 = vmatprep.subr.mxu0 0.0
    %95 = vmatpush1.msra.mxu0 0.0
    %96 = vmatprep.subr.mxu0 0.0
    %97 = vmatpush1.msra.mxu0 0.0
    %98 = vmatprep.subr.mxu0 0.0
    %99 = vmatpush1.msra.mxu0 0.0
    %100 = vmatprep.subr.mxu0 0.0
    %101 = vmatpush1.msra.mxu0 0.0
    %102 = vmatprep.subr.mxu0 0.0
    %103 = vmatpush1.msra.mxu0 0.0
    %104 = vmatprep.subr.mxu0 0.0
    %105 = vmatpush1.msra.mxu0 0.0
    %106 = vmatprep.subr.mxu0 0.0
    %107 = vmatpush1.msra.mxu0 0.0
    %108 = vmatprep.subr.mxu0 0.0
    %109 = vmatpush1.msra.mxu0 0.0
    %110 = vmatprep.subr.mxu0 0.0
    %111 = vmatpush1.msra.mxu0 0.0
    %112 = vmatprep.subr.mxu0 0.0
    %113 = vmatpush1.msra.mxu0 0.0
    %114 = vmatprep.subr.mxu0 0.0
    %115 = vmatpush1.msra.mxu0 0.0
    %116 = vmatprep.subr.mxu0 0.0
    %117 = vmatpush1.msra.mxu0 0.0
    %118 = vmatprep.subr.mxu0 0.0
    %119 = vmatpush1.msra.mxu0 0.0
    %120 = vmatprep.subr.mxu0 0.0
    %121 = vmatpush1.msra.mxu0 0.0
    %122 = vmatprep.subr.mxu0 0.0
    %123 = vmatpush1.msra.mxu0 0.0
    %124 = vmatprep.subr.mxu0 0.0
    %125 = vmatpush1.msra.mxu0 0.0
    %126 = vmatprep.subr.mxu0 0.0
    %127 = vmatpush1.msra.mxu0 0.0
    %128 = vmatprep.subr.mxu0 0.0
    %129 = vmatpush1.msra.mxu0 0.0
    %130 = vmatprep.subr.mxu0 0.0
    %131 = vmatpush1.msra.mxu0 0.0
    %132 = vmatprep.subr.mxu0 0.0
    %133 = vmatpush1.msra.mxu0 0.0
    %134 = vmatprep.subr.mxu0 0.0
    %135 = vmatpush1.msra.mxu0 0.0
    %136 = vmatprep.subr.mxu0 0.0
    %137 = vmatpush1.msra.mxu0 0.0
    %138 = vmatprep.subr.mxu0 0.0
    %139 = vmatpush1.msra.mxu0 0.0
    %140 = vmatprep.subr.mxu0 0.0
    %141 = vmatpush1.msra.mxu0 0.0
    %142 = vmatprep.subr.mxu0 0.0
    %143 = vmatpush1.msra.mxu0 0.0
    %144 = vmatprep.mubr.f32.mxu0 0.0
    %145 = vmatmul.mubr.f32.gmra.mrb[0].mxu0 %v69
    %v146 = vpop.f32.mrb[0].mxu0
    %v147 = vadd.f32 0.0, %v146
    %v148 = vpop.f32.mrb[0].mxu0
    %149 = vmatprep.mubr.f32.mxu0 0.0
    %150 = vmatmul.mubr.f32.gmra.mrb[0].mxu0 %v72
    %v151 = vpop.f32.mrb[0].mxu0
    %v152 = vadd.f32 0.0, %v151
    %v153 = vpop.f32.mrb[0].mxu0
    %154 = vmatprep.mubr.f32.mxu0 0.0
    %155 = vmatmul.mubr.f32.gmra.mrb[0].mxu0 %v75
    %v156 = vpop.f32.mrb[0].mxu0
    %v157 = vadd.f32 0.0, %v156
    %v158 = vpop.f32.mrb[0].mxu0
    %159 = vmatprep.mubr.f32.mxu0 0.0
    %160 = vmatmul.mubr.f32.gmra.mrb[0].mxu0 %v78
    %v161 = vpop.f32.mrb[0].mxu0
    %v162 = vadd.f32 0.0, %v161
    %v163 = vpop.f32.mrb[0].mxu0
    %164 = vdwg.mxu0
    %v165 = vld [vmem:[#allocation7] sm:$0xff]
    %v166 = vld [vmem:[#allocation7 + $0x8] sm:$0xff]
    %v167 = vld [vmem:[#allocation7 + $0x10] sm:$0xff]
    %v168 = vld [vmem:[#allocation7 + $0x18] sm:$0xff]
    %v169 = vld [vmem:[#allocation7 + $0x20] sm:$0xff]
    %v170 = vld [vmem:[#allocation7 + $0x28] sm:$0xff]
    %v171 = vld [vmem:[#allocation7 + $0x30] sm:$0xff]
    %v172 = vld [vmem:[#allocation7 + $0x38] sm:$0xff]
    %s173 = scalar_lea.vmem [#allocation5], 32
    %v174 = vld [vmem:[%s173] sm:$0xff]
    %v175 = vld [vmem:[%s173 + $0x8] sm:$0xff]
    %v176 = vld [vmem:[%s173 + $0x10] sm:$0xff]
    %v177 = vld [vmem:[%s173 + $0x18] sm:$0xff]
    %v179 = vsel %vm67, %v174, 0
    %v182 = vsel %vm67, %v175, 0
    %v185 = vsel %vm67, %v176, 0
    %v188 = vsel %vm67, %v177, 0
    %190 = vmatprep.subr.mxu0 0.0
    %191 = vmatpush1.msra.mxu0 %v59
    %192 = vmatprep.subr.mxu0 0.0
    %193 = vmatpush1.msra.mxu0 %v60
    %194 = vmatprep.subr.mxu0 0.0
    %195 = vmatpush1.msra.mxu0 %v61
    %196 = vmatprep.subr.mxu0 0.0
    %197 = vmatpush1.msra.mxu0 %v62
    %198 = vmatprep.subr.mxu0 0.0
    %199 = vmatpush1.msra.mxu0 0.0
    %200 = vmatprep.subr.mxu0 0.0
    %201 = vmatpush1.msra.mxu0 0.0
    %202 = vmatprep.subr.mxu0 0.0
    %203 = vmatpush1.msra.mxu0 0.0
    %204 = vmatprep.subr.mxu0 0.0
    %205 = vmatpush1.msra.mxu0 0.0
    %206 = vmatprep.subr.mxu0 0.0
    %207 = vmatpush1.msra.mxu0 0.0
    %208 = vmatprep.subr.mxu0 0.0
    %209 = vmatpush1.msra.mxu0 0.0
    %210 = vmatprep.subr.mxu0 0.0
    %211 = vmatpush1.msra.mxu0 0.0
    %212 = vmatprep.subr.mxu0 0.0
    %213 = vmatpush1.msra.mxu0 0.0
    %214 = vmatprep.subr.mxu0 0.0
    %215 = vmatpush1.msra.mxu0 0.0
    %216 = vmatprep.subr.mxu0 0.0
    %217 = vmatpush1.msra.mxu0 0.0
    %218 = vmatprep.subr.mxu0 0.0
    %219 = vmatpush1.msra.mxu0 0.0
    %220 = vmatprep.subr.mxu0 0.0
    %221 = vmatpush1.msra.mxu0 0.0
    %222 = vmatprep.subr.mxu0 0.0
    %223 = vmatpush1.msra.mxu0 0.0
    %224 = vmatprep.subr.mxu0 0.0
    %225 = vmatpush1.msra.mxu0 0.0
    %226 = vmatprep.subr.mxu0 0.0
    %227 = vmatpush1.msra.mxu0 0.0
    %228 = vmatprep.subr.mxu0 0.0
    %229 = vmatpush1.msra.mxu0 0.0
    %230 = vmatprep.subr.mxu0 0.0
    %231 = vmatpush1.msra.mxu0 0.0
    %232 = vmatprep.subr.mxu0 0.0
    %233 = vmatpush1.msra.mxu0 0.0
    %234 = vmatprep.subr.mxu0 0.0
    %235 = vmatpush1.msra.mxu0 0.0
    %236 = vmatprep.subr.mxu0 0.0
    %237 = vmatpush1.msra.mxu0 0.0
    %238 = vmatprep.subr.mxu0 0.0
    %239 = vmatpush1.msra.mxu0 0.0
    %240 = vmatprep.subr.mxu0 0.0
    %241 = vmatpush1.msra.mxu0 0.0
    %242 = vmatprep.subr.mxu0 0.0
    %243 = vmatpush1.msra.mxu0 0.0
    %244 = vmatprep.subr.mxu0 0.0
    %245 = vmatpush1.msra.mxu0 0.0
    %246 = vmatprep.subr.mxu0 0.0
    %247 = vmatpush1.msra.mxu0 0.0
    %248 = vmatprep.subr.mxu0 0.0
    %249 = vmatpush1.msra.mxu0 0.0
    %250 = vmatprep.subr.mxu0 0.0
    %251 = vmatpush1.msra.mxu0 0.0
    %252 = vmatprep.subr.mxu0 0.0
    %253 = vmatpush1.msra.mxu0 0.0
    %254 = vmatprep.mubr.f32.mxu0 0.0
    %255 = vmatmul.mubr.f32.gmra.mrb[0].mxu0 %v179
    %v256 = vpop.f32.mrb[0].mxu0
    %v257 = vadd.f32 0.0, %v256
    %v258 = vpop.f32.mrb[0].mxu0
    %259 = vmatprep.mubr.f32.mxu0 0.0
    %260 = vmatmul.mubr.f32.gmra.mrb[0].mxu0 %v182
    %v261 = vpop.f32.mrb[0].mxu0
    %v262 = vadd.f32 0.0, %v261
    %v263 = vpop.f32.mrb[0].mxu0
    %264 = vmatprep.mubr.f32.mxu0 0.0
    %265 = vmatmul.mubr.f32.gmra.mrb[0].mxu0 %v185
    %v266 = vpop.f32.mrb[0].mxu0
    %v267 = vadd.f32 0.0, %v266
    %v268 = vpop.f32.mrb[0].mxu0
    %269 = vmatprep.mubr.f32.mxu0 0.0
    %270 = vmatmul.mubr.f32.gmra.mrb[0].mxu0 %v188
    %v271 = vpop.f32.mrb[0].mxu0
    %v272 = vadd.f32 0.0, %v271
    %v273 = vpop.f32.mrb[0].mxu0
    %274 = vdwg.mxu0
    %s275 = scalar_lea.vmem [#allocation7], 64
    %v276 = vld [vmem:[%s275] sm:$0xff]
    %v277 = vld [vmem:[%s275 + $0x8] sm:$0xff]
    %v278 = vld [vmem:[%s275 + $0x10] sm:$0xff]
    %v279 = vld [vmem:[%s275 + $0x18] sm:$0xff]
    %v280 = vld [vmem:[%s275 + $0x20] sm:$0xff]
    %v281 = vld [vmem:[%s275 + $0x28] sm:$0xff]
    %v282 = vld [vmem:[%s275 + $0x30] sm:$0xff]
    %v283 = vld [vmem:[%s275 + $0x38] sm:$0xff]
    %vm284 = vcmask 523264
    %v286 = vsel %vm284, %v257, 0
    %v289 = vsel %vm284, %v262, 0
    %v292 = vsel %vm284, %v267, 0
    %v295 = vsel %vm284, %v272, 0
    %297 = vmatprep.subr.mxu0 0.0
    %298 = vmatpush1.msra.mxu0 %v276
    %299 = vmatprep.subr.mxu0 0.0
    %300 = vmatpush1.msra.mxu0 %v277
    %301 = vmatprep.subr.mxu0 0.0
    %302 = vmatpush1.msra.mxu0 %v278
    %303 = vmatprep.subr.mxu0 0.0
    %304 = vmatpush1.msra.mxu0 %v279
    %305 = vmatprep.subr.mxu0 0.0
    %306 = vmatpush1.msra.mxu0 %v280
    %307 = vmatprep.subr.mxu0 0.0
    %308 = vmatpush1.msra.mxu0 %v281
    %309 = vmatprep.subr.mxu0 0.0
    %310 = vmatpush1.msra.mxu0 %v282
    %311 = vmatprep.subr.mxu0 0.0
    %312 = vmatpush1.msra.mxu0 %v283
    %313 = vmatprep.subr.mxu0 0.0
    %314 = vmatpush1.msra.mxu0 0.0
    %315 = vmatprep.subr.mxu0 0.0
    %316 = vmatpush1.msra.mxu0 0.0
    %317 = vmatprep.subr.mxu0 0.0
    %318 = vmatpush1.msra.mxu0 0.0
    %319 = vmatprep.subr.mxu0 0.0
    %320 = vmatpush1.msra.mxu0 0.0
    %321 = vmatprep.subr.mxu0 0.0
    %322 = vmatpush1.msra.mxu0 0.0
    %323 = vmatprep.subr.mxu0 0.0
    %324 = vmatpush1.msra.mxu0 0.0
    %325 = vmatprep.subr.mxu0 0.0
    %326 = vmatpush1.msra.mxu0 0.0
    %327 = vmatprep.subr.mxu0 0.0
    %328 = vmatpush1.msra.mxu0 0.0
    %329 = vmatprep.subr.mxu0 0.0
    %330 = vmatpush1.msra.mxu0 0.0
    %331 = vmatprep.subr.mxu0 0.0
    %332 = vmatpush1.msra.mxu0 0.0
    %333 = vmatprep.subr.mxu0 0.0
    %334 = vmatpush1.msra.mxu0 0.0
    %335 = vmatprep.subr.mxu0 0.0
    %336 = vmatpush1.msra.mxu0 0.0
    %337 = vmatprep.subr.mxu0 0.0
    %338 = vmatpush1.msra.mxu0 0.0
    %339 = vmatprep.subr.mxu0 0.0
    %340 = vmatpush1.msra.mxu0 0.0
    %341 = vmatprep.subr.mxu0 0.0
    %342 = vmatpush1.msra.mxu0 0.0
    %343 = vmatprep.subr.mxu0 0.0
    %344 = vmatpush1.msra.mxu0 0.0
    %345 = vmatprep.subr.mxu0 0.0
    %346 = vmatpush1.msra.mxu0 0.0
    %347 = vmatprep.subr.mxu0 0.0
    %348 = vmatpush1.msra.mxu0 0.0
    %349 = vmatprep.subr.mxu0 0.0
    %350 = vmatpush1.msra.mxu0 0.0
    %351 = vmatprep.subr.mxu0 0.0
    %352 = vmatpush1.msra.mxu0 0.0
    %353 = vmatprep.subr.mxu0 0.0
    %354 = vmatpush1.msra.mxu0 0.0
    %355 = vmatprep.subr.mxu0 0.0
    %356 = vmatpush1.msra.mxu0 0.0
    %357 = vmatprep.subr.mxu0 0.0
    %358 = vmatpush1.msra.mxu0 0.0
    %359 = vmatprep.subr.mxu0 0.0
    %360 = vmatpush1.msra.mxu0 0.0
    %361 = vmatprep.mubr.f32.mxu0 0.0
    %362 = vmatmul.mubr.f32.gmra.mrb[0].mxu0 %v286
    %v363 = vpop.f32.mrb[0].mxu0
    %v364 = vadd.f32 0.0, %v363
    %v365 = vpop.f32.mrb[0].mxu0
    %366 = vmatprep.mubr.f32.mxu0 0.0
    %367 = vmatmul.mubr.f32.gmra.mrb[0].mxu0 %v289
    %v368 = vpop.f32.mrb[0].mxu0
    %v369 = vadd.f32 0.0, %v368
    %v370 = vpop.f32.mrb[0].mxu0
    %371 = vmatprep.mubr.f32.mxu0 0.0
    %372 = vmatmul.mubr.f32.gmra.mrb[0].mxu0 %v292
    %v373 = vpop.f32.mrb[0].mxu0
    %v374 = vadd.f32 0.0, %v373
    %v375 = vpop.f32.mrb[0].mxu0
    %376 = vmatprep.mubr.f32.mxu0 0.0
    %377 = vmatmul.mubr.f32.gmra.mrb[0].mxu0 %v295
    %v378 = vpop.f32.mrb[0].mxu0
    %v379 = vadd.f32 0.0, %v378
    %v380 = vpop.f32.mrb[0].mxu0
    %381 = vdwg.mxu0
    %v383 = vsel %vm284, %v147, 0
    %v386 = vsel %vm284, %v152, 0
    %v389 = vsel %vm284, %v157, 0
    %v392 = vsel %vm284, %v162, 0
    %394 = vmatprep.subr.mxu0 0.0
    %395 = vmatpush1.msra.mxu0 %v165
    %396 = vmatprep.subr.mxu0 0.0
    %397 = vmatpush1.msra.mxu0 %v166
    %398 = vmatprep.subr.mxu0 0.0
    %399 = vmatpush1.msra.mxu0 %v167
    %400 = vmatprep.subr.mxu0 0.0
    %401 = vmatpush1.msra.mxu0 %v168
    %402 = vmatprep.subr.mxu0 0.0
    %403 = vmatpush1.msra.mxu0 %v169
    %404 = vmatprep.subr.mxu0 0.0
    %405 = vmatpush1.msra.mxu0 %v170
    %406 = vmatprep.subr.mxu0 0.0
    %407 = vmatpush1.msra.mxu0 %v171
    %408 = vmatprep.subr.mxu0 0.0
    %409 = vmatpush1.msra.mxu0 %v172
    %410 = vmatprep.subr.mxu0 0.0
    %411 = vmatpush1.msra.mxu0 0.0
    %412 = vmatprep.subr.mxu0 0.0
    %413 = vmatpush1.msra.mxu0 0.0
    %414 = vmatprep.subr.mxu0 0.0
    %415 = vmatpush1.msra.mxu0 0.0
    %416 = vmatprep.subr.mxu0 0.0
    %417 = vmatpush1.msra.mxu0 0.0
    %418 = vmatprep.subr.mxu0 0.0
    %419 = vmatpush1.msra.mxu0 0.0
    %420 = vmatprep.subr.mxu0 0.0
    %421 = vmatpush1.msra.mxu0 0.0
    %422 = vmatprep.subr.mxu0 0.0
    %423 = vmatpush1.msra.mxu0 0.0
    %424 = vmatprep.subr.mxu0 0.0
    %425 = vmatpush1.msra.mxu0 0.0
    %426 = vmatprep.subr.mxu0 0.0
    %427 = vmatpush1.msra.mxu0 0.0
    %428 = vmatprep.subr.mxu0 0.0
    %429 = vmatpush1.msra.mxu0 0.0
    %430 = vmatprep.subr.mxu0 0.0
    %431 = vmatpush1.msra.mxu0 0.0
    %432 = vmatprep.subr.mxu0 0.0
    %433 = vmatpush1.msra.mxu0 0.0
    %434 = vmatprep.subr.mxu0 0.0
    %435 = vmatpush1.msra.mxu0 0.0
    %436 = vmatprep.subr.mxu0 0.0
    %437 = vmatpush1.msra.mxu0 0.0
    %438 = vmatprep.subr.mxu0 0.0
    %439 = vmatpush1.msra.mxu0 0.0
    %440 = vmatprep.subr.mxu0 0.0
    %441 = vmatpush1.msra.mxu0 0.0
    %442 = vmatprep.subr.mxu0 0.0
    %443 = vmatpush1.msra.mxu0 0.0
    %444 = vmatprep.subr.mxu0 0.0
    %445 = vmatpush1.msra.mxu0 0.0
    %446 = vmatprep.subr.mxu0 0.0
    %447 = vmatpush1.msra.mxu0 0.0
    %448 = vmatprep.subr.mxu0 0.0
    %449 = vmatpush1.msra.mxu0 0.0
    %450 = vmatprep.subr.mxu0 0.0
    %451 = vmatpush1.msra.mxu0 0.0
    %452 = vmatprep.subr.mxu0 0.0
    %453 = vmatpush1.msra.mxu0 0.0
    %454 = vmatprep.subr.mxu0 0.0
    %455 = vmatpush1.msra.mxu0 0.0
    %456 = vmatprep.subr.mxu0 0.0
    %457 = vmatpush1.msra.mxu0 0.0
    %458 = vmatprep.mubr.f32.mxu0 0.0
    %459 = vmatmul.mubr.f32.gmra.mrb[0].mxu0 %v383
    %v460 = vpop.f32.mrb[0].mxu0
    %v461 = vadd.f32 %v364, %v460
    %v462 = vpop.f32.mrb[0].mxu0
    %463 = vmatprep.mubr.f32.mxu0 0.0
    %464 = vmatmul.mubr.f32.gmra.mrb[0].mxu0 %v386
    %v465 = vpop.f32.mrb[0].mxu0
    %v466 = vadd.f32 %v369, %v465
    %v467 = vpop.f32.mrb[0].mxu0
    %468 = vmatprep.mubr.f32.mxu0 0.0
    %469 = vmatmul.mubr.f32.gmra.mrb[0].mxu0 %v389
    %v470 = vpop.f32.mrb[0].mxu0
    %v471 = vadd.f32 %v374, %v470
    %v472 = vpop.f32.mrb[0].mxu0
    %473 = vmatprep.mubr.f32.mxu0 0.0
    %474 = vmatmul.mubr.f32.gmra.mrb[0].mxu0 %v392
    %v475 = vpop.f32.mrb[0].mxu0
    %v476 = vadd.f32 %v379, %v475
    %v477 = vpop.f32.mrb[0].mxu0
    %478 = vdwg.mxu0
    %s479 = scalar_lea.vmem [#allocation5], 64
    %v480 = vld [vmem:[%s479] sm:$0xff]
    %v481 = vld [vmem:[%s479 + $0x8] sm:$0xff]
    %v482 = vld [vmem:[%s479 + $0x10] sm:$0xff]
    %v483 = vld [vmem:[%s479 + $0x18] sm:$0xff]
    %v485 = vsel %vm67, %v480, 0
    %v488 = vsel %vm67, %v481, 0
    %v491 = vsel %vm67, %v482, 0
    %v494 = vsel %vm67, %v483, 0
    %496 = vmatprep.subr.mxu0 0.0
    %497 = vmatpush1.msra.mxu0 %v59
    %498 = vmatprep.subr.mxu0 0.0
    %499 = vmatpush1.msra.mxu0 %v60
    %500 = vmatprep.subr.mxu0 0.0
    %501 = vmatpush1.msra.mxu0 %v61
    %502 = vmatprep.subr.mxu0 0.0
    %503 = vmatpush1.msra.mxu0 %v62
    %504 = vmatprep.subr.mxu0 0.0
    %505 = vmatpush1.msra.mxu0 0.0
    %506 = vmatprep.subr.mxu0 0.0
    %507 = vmatpush1.msra.mxu0 0.0
    %508 = vmatprep.subr.mxu0 0.0
    %509 = vmatpush1.msra.mxu0 0.0
    %510 = vmatprep.subr.mxu0 0.0
    %511 = vmatpush1.msra.mxu0 0.0
    %512 = vmatprep.subr.mxu0 0.0
    %513 = vmatpush1.msra.mxu0 0.0
    %514 = vmatprep.subr.mxu0 0.0
    %515 = vmatpush1.msra.mxu0 0.0
    %516 = vmatprep.subr.mxu0 0.0
    %517 = vmatpush1.msra.mxu0 0.0
    %518 = vmatprep.subr.mxu0 0.0
    %519 = vmatpush1.msra.mxu0 0.0
    %520 = vmatprep.subr.mxu0 0.0
    %521 = vmatpush1.msra.mxu0 0.0
    %522 = vmatprep.subr.mxu0 0.0
    %523 = vmatpush1.msra.mxu0 0.0
    %524 = vmatprep.subr.mxu0 0.0
    %525 = vmatpush1.msra.mxu0 0.0
    %526 = vmatprep.subr.mxu0 0.0
    %527 = vmatpush1.msra.mxu0 0.0
    %528 = vmatprep.subr.mxu0 0.0
    %529 = vmatpush1.msra.mxu0 0.0
    %530 = vmatprep.subr.mxu0 0.0
    %531 = vmatpush1.msra.mxu0 0.0
    %532 = vmatprep.subr.mxu0 0.0
    %533 = vmatpush1.msra.mxu0 0.0
    %534 = vmatprep.subr.mxu0 0.0
    %535 = vmatpush1.msra.mxu0 0.0
    %536 = vmatprep.subr.mxu0 0.0
    %537 = vmatpush1.msra.mxu0 0.0
    %538 = vmatprep.subr.mxu0 0.0
    %539 = vmatpush1.msra.mxu0 0.0
    %540 = vmatprep.subr.mxu0 0.0
    %541 = vmatpush1.msra.mxu0 0.0
    %542 = vmatprep.subr.mxu0 0.0
    %543 = vmatpush1.msra.mxu0 0.0
    %544 = vmatprep.subr.mxu0 0.0
    %545 = vmatpush1.msra.mxu0 0.0
    %546 = vmatprep.subr.mxu0 0.0
    %547 = vmatpush1.msra.mxu0 0.0
    %548 = vmatprep.subr.mxu0 0.0
    %549 = vmatpush1.msra.mxu0 0.0
    %550 = vmatprep.subr.mxu0 0.0
    %551 = vmatpush1.msra.mxu0 0.0
    %552 = vmatprep.subr.mxu0 0.0
    %553 = vmatpush1.msra.mxu0 0.0
    %554 = vmatprep.subr.mxu0 0.0
    %555 = vmatpush1.msra.mxu0 0.0
    %556 = vmatprep.subr.mxu0 0.0
    %557 = vmatpush1.msra.mxu0 0.0
    %558 = vmatprep.subr.mxu0 0.0
    %559 = vmatpush1.msra.mxu0 0.0
    %560 = vmatprep.mubr.f32.mxu0 0.0
    %561 = vmatmul.mubr.f32.gmra.mrb[0].mxu0 %v485
    %v562 = vpop.f32.mrb[0].mxu0
    %v563 = vadd.f32 0.0, %v562
    %v564 = vpop.f32.mrb[0].mxu0
    %565 = vmatprep.mubr.f32.mxu0 0.0
    %566 = vmatmul.mubr.f32.gmra.mrb[0].mxu0 %v488
    %v567 = vpop.f32.mrb[0].mxu0
    %v568 = vadd.f32 0.0, %v567
    %v569 = vpop.f32.mrb[0].mxu0
    %570 = vmatprep.mubr.f32.mxu0 0.0
    %571 = vmatmul.mubr.f32.gmra.mrb[0].mxu0 %v491
    %v572 = vpop.f32.mrb[0].mxu0
    %v573 = vadd.f32 0.0, %v572
    %v574 = vpop.f32.mrb[0].mxu0
    %575 = vmatprep.mubr.f32.mxu0 0.0
    %576 = vmatmul.mubr.f32.gmra.mrb[0].mxu0 %v494
    %v577 = vpop.f32.mrb[0].mxu0
    %v578 = vadd.f32 0.0, %v577
    %v579 = vpop.f32.mrb[0].mxu0
    %580 = vdwg.mxu0
    %s581 = scalar_lea.vmem [#allocation7], 128
    %v582 = vld [vmem:[%s581] sm:$0xff]
    %v583 = vld [vmem:[%s581 + $0x8] sm:$0xff]
    %v584 = vld [vmem:[%s581 + $0x10] sm:$0xff]
    %v585 = vld [vmem:[%s581 + $0x18] sm:$0xff]
    %v586 = vld [vmem:[%s581 + $0x20] sm:$0xff]
    %v587 = vld [vmem:[%s581 + $0x28] sm:$0xff]
    %v588 = vld [vmem:[%s581 + $0x30] sm:$0xff]
    %v589 = vld [vmem:[%s581 + $0x38] sm:$0xff]
    %v591 = vsel %vm284, %v563, 0
    %v594 = vsel %vm284, %v568, 0
    %v597 = vsel %vm284, %v573, 0
    %v600 = vsel %vm284, %v578, 0
    %602 = vmatprep.subr.mxu0 0.0
    %603 = vmatpush1.msra.mxu0 %v582
    %604 = vmatprep.subr.mxu0 0.0
    %605 = vmatpush1.msra.mxu0 %v583
    %606 = vmatprep.subr.mxu0 0.0
    %607 = vmatpush1.msra.mxu0 %v584
    %608 = vmatprep.subr.mxu0 0.0
    %609 = vmatpush1.msra.mxu0 %v585
    %610 = vmatprep.subr.mxu0 0.0
    %611 = vmatpush1.msra.mxu0 %v586
    %612 = vmatprep.subr.mxu0 0.0
    %613 = vmatpush1.msra.mxu0 %v587
    %614 = vmatprep.subr.mxu0 0.0
    %615 = vmatpush1.msra.mxu0 %v588
    %616 = vmatprep.subr.mxu0 0.0
    %617 = vmatpush1.msra.mxu0 %v589
    %618 = vmatprep.subr.mxu0 0.0
    %619 = vmatpush1.msra.mxu0 0.0
    %620 = vmatprep.subr.mxu0 0.0
    %621 = vmatpush1.msra.mxu0 0.0
    %622 = vmatprep.subr.mxu0 0.0
    %623 = vmatpush1.msra.mxu0 0.0
    %624 = vmatprep.subr.mxu0 0.0
    %625 = vmatpush1.msra.mxu0 0.0
    %626 = vmatprep.subr.mxu0 0.0
    %627 = vmatpush1.msra.mxu0 0.0
    %628 = vmatprep.subr.mxu0 0.0
    %629 = vmatpush1.msra.mxu0 0.0
    %630 = vmatprep.subr.mxu0 0.0
    %631 = vmatpush1.msra.mxu0 0.0
    %632 = vmatprep.subr.mxu0 0.0
    %633 = vmatpush1.msra.mxu0 0.0
    %634 = vmatprep.subr.mxu0 0.0
    %635 = vmatpush1.msra.mxu0 0.0
    %636 = vmatprep.subr.mxu0 0.0
    %637 = vmatpush1.msra.mxu0 0.0
    %638 = vmatprep.subr.mxu0 0.0
    %639 = vmatpush1.msra.mxu0 0.0
    %640 = vmatprep.subr.mxu0 0.0
    %641 = vmatpush1.msra.mxu0 0.0
    %642 = vmatprep.subr.mxu0 0.0
    %643 = vmatpush1.msra.mxu0 0.0
    %644 = vmatprep.subr.mxu0 0.0
    %645 = vmatpush1.msra.mxu0 0.0
    %646 = vmatprep.subr.mxu0 0.0
    %647 = vmatpush1.msra.mxu0 0.0
    %648 = vmatprep.subr.mxu0 0.0
    %649 = vmatpush1.msra.mxu0 0.0
    %650 = vmatprep.subr.mxu0 0.0
    %651 = vmatpush1.msra.mxu0 0.0
    %652 = vmatprep.subr.mxu0 0.0
    %653 = vmatpush1.msra.mxu0 0.0
    %654 = vmatprep.subr.mxu0 0.0
    %655 = vmatpush1.msra.mxu0 0.0
    %656 = vmatprep.subr.mxu0 0.0
    %657 = vmatpush1.msra.mxu0 0.0
    %658 = vmatprep.subr.mxu0 0.0
    %659 = vmatpush1.msra.mxu0 0.0
    %660 = vmatprep.subr.mxu0 0.0
    %661 = vmatpush1.msra.mxu0 0.0
    %662 = vmatprep.subr.mxu0 0.0
    %663 = vmatpush1.msra.mxu0 0.0
    %664 = vmatprep.subr.mxu0 0.0
    %665 = vmatpush1.msra.mxu0 0.0
    %666 = vmatprep.mubr.f32.mxu0 0.0
    %667 = vmatmul.mubr.f32.gmra.mrb[0].mxu0 %v591
    %v668 = vpop.f32.mrb[0].mxu0
    %v669 = vadd.f32 0.0, %v668
    %v670 = vpop.f32.mrb[0].mxu0
    %671 = vmatprep.mubr.f32.mxu0 0.0
    %672 = vmatmul.mubr.f32.gmra.mrb[0].mxu0 %v594
    %v673 = vpop.f32.mrb[0].mxu0
    %v674 = vadd.f32 0.0, %v673
    %v675 = vpop.f32.mrb[0].mxu0
    %676 = vmatprep.mubr.f32.mxu0 0.0
    %677 = vmatmul.mubr.f32.gmra.mrb[0].mxu0 %v597
    %v678 = vpop.f32.mrb[0].mxu0
    %v679 = vadd.f32 0.0, %v678
    %v680 = vpop.f32.mrb[0].mxu0
    %681 = vmatprep.mubr.f32.mxu0 0.0
    %682 = vmatmul.mubr.f32.gmra.mrb[0].mxu0 %v600
    %v683 = vpop.f32.mrb[0].mxu0
    %v684 = vadd.f32 0.0, %v683
    %v685 = vpop.f32.mrb[0].mxu0
    %686 = vdwg.mxu0
    %v687 = vadd.f32 %v461, %v669
    %v688 = vadd.f32 %v466, %v674
    %v689 = vadd.f32 %v471, %v679
    %v690 = vadd.f32 %v476, %v684
    %v691 = vld [vmem:[%s3] sm:$0x1]
    %v693 = vlaneseq
    %v694 = vshrl.u32 %v693, 7
    %v695 = vsub.s32 0, %v694
    %v696 = vrot.slane %v691, %v695
    %v698 = vadd.f32 %v687, %v696
    %v699 = vadd.f32 %v688, %v696
    %v700 = vadd.f32 %v689, %v696
    %v701 = vadd.f32 %v690, %v696
    %702 = vst [vmem:[#allocation8] sm:$0xff] %v698
    %703 = vst [vmem:[#allocation8 + $0x8] sm:$0xff] %v699
    %704 = vst [vmem:[#allocation8 + $0x10] sm:$0xff] %v700
    %705 = vst [vmem:[#allocation8 + $0x18] sm:$0xff] %v701
    // Predicated region
    $region30: #{tpu_custom_call.1} parent=1 // pred_check
      _
    $region31: #{tpu_custom_call.1} parent=1 // pred_check_branch
      %707 = sbr.rel (0) target = $region33
    $region32: #{tpu_custom_call.1} parent=1 // pred_region
      %s709 = ssub.s32 512, 512
      %710 = vsyncadd [#allocation4], %s709
      %s711 = sshll.u32 [#allocation8], 4
      %s712 = int_to_ptr.vmem [resolvable:$true] %s711
      %717 = dma.vmem_to_hbm [thread:$0]  %s712, 512, %s4, [#allocation4], 128, 128, 8
    $region33: #{tpu_custom_call.1} parent=1 // pred_fallthru
      _
    // Predicated region
    $region34: #{tpu_custom_call.1} parent=1 // pred_check
      _
    $region35: #{tpu_custom_call.1} parent=1 // pred_check_branch
      %719 = sbr.rel (0) target = $region37
    $region36: #{tpu_custom_call.1} parent=1 // pred_region
      %720 = dma.done [#allocation4], 512
    $region37: #{tpu_custom_call.1} parent=1 // pred_fallthru
      _
    %721 = vsyncpa [#allocation3], 1
    %722 = vsyncpa [#allocation6], 1
    %723 = vsyncpa [#allocation4], 1

</llo_original>
